<compile_context>
chip_gen: v5e
topology: v5e:2x2
jax: 0.10.0
libtpu: 0.0.40
codegen_flags: <defaults>
</compile_context>

<pallas_src>
import functools
import math

import jax
import jax.numpy as jnp
from jax.experimental import pallas as pl
from jax.experimental.pallas import tpu as pltpu


def _round_up(a, b):
    return ((a + b - 1) // b) * b


def _make_mlp_kernel(num_layers, use_non_linear_output):
    """Kernel for `num_layers` Linear layers (ReLU between, optional ReLU at end)."""

    def kernel(x_ref, *refs):
        # refs = (w0, b0, w1, b1, ..., w_{L-1}, b_{L-1}, out_ref)
        out_ref = refs[-1]
        wb_refs = refs[:-1]
        h = x_ref[...].astype(jnp.float32)            # activations kept f32
        for l in range(num_layers):
            w = wb_refs[2 * l][...]                   # (in_l, out_l), f32 or bf16
            b = wb_refs[2 * l + 1][...].astype(jnp.float32)   # (1, out_l)
            lhs = h if w.dtype == jnp.float32 else h.astype(w.dtype)
            h = jnp.dot(lhs, w, preferred_element_type=jnp.float32) + b
            if (l != num_layers - 1) or use_non_linear_output:
                h = jnp.maximum(h, 0.0)               # ReLU on the VPU
        out_ref[...] = h.astype(out_ref.dtype)

    return kernel


def mlp_pallas(x, weights, biases, out_shape, use_non_linear_output=False, *,
               tile_m=512, param_dtype=None):
    """Run the fused MLP kernel.

    x       : (..., in_size) float32
    weights : list of (in_l, out_l) matrices (already transposed vs. PyTorch's (out, in))
    biases  : list of (out_l,) vectors
    param_dtype : optional dtype for the weights fed to the MXU (e.g. jnp.bfloat16)
    """
    num_layers = len(weights)
    in_size = weights[0].shape[0]
    out_size = weights[-1].shape[1]

    lead_shape = x.shape[:-1]
    m = int(math.prod(lead_shape)) if lead_shape else 1
    x2d = x.reshape(m, in_size)

    if param_dtype is not None:
        weights = [w.astype(param_dtype) for w in weights]
    biases_2d = [b.reshape(1, -1).astype(jnp.float32) for b in biases]

    # Large MXU-aligned row tile; shrink for tiny problems (multiple of 8 sublanes).
    tile_m_eff = max(8, min(_round_up(tile_m, 8), _round_up(m, 8)))
    grid_m = pl.cdiv(m, tile_m_eff)   # no jnp.pad: Pallas masks the ragged tail block

    kernel = _make_mlp_kernel(num_layers, use_non_linear_output)

    # Advisory cost estimate for XLA scheduling around the custom call.
    flops = 2 * m * sum(w.shape[0] * w.shape[1] for w in weights)
    param_bytes = (sum(w.size * w.dtype.itemsize for w in weights)
                   + sum(b.size * b.dtype.itemsize for b in biases_2d))
    bytes_accessed = (x2d.size * x2d.dtype.itemsize
                      + param_bytes
                      + m * out_size * x.dtype.itemsize)
    cost = pl.CostEstimate(flops=flops, transcendentals=0,
                           bytes_accessed=bytes_accessed)

    def run(single_buffer_params):
        extra = {"pipeline_mode": pl.Buffered(1)} if single_buffer_params else {}

        in_specs = [pl.BlockSpec((tile_m_eff, in_size), lambda i: (i, 0))]
        for w, b in zip(weights, biases_2d):
            # Full weight/bias resident; index_map is grid-invariant.
            in_specs.append(pl.BlockSpec(w.shape, lambda i: (0, 0), **extra))
            in_specs.append(pl.BlockSpec(b.shape, lambda i: (0, 0), **extra))

        # VMEM budget: double-buffered x/out tiles + params + activation slack.
        buf = 1 if single_buffer_params else 2
        widths = [in_size] + [w.shape[1] for w in weights]
        act_bytes = tile_m_eff * max(widths) * 4
        vmem_needed = (2 * tile_m_eff * in_size * x.dtype.itemsize
                       + 2 * tile_m_eff * out_size * x.dtype.itemsize
                       + buf * param_bytes
                       + 4 * act_bytes)
        # Keep within the smallest physical VMEM across generations (v7x: 64 MiB).
        vmem_limit = int(min(64 * 1024 * 1024,
                             max(32 * 1024 * 1024, 2 * vmem_needed)))

        return pl.pallas_call(
            kernel,
            out_shape=jax.ShapeDtypeStruct((m, out_size), x.dtype),
            grid_spec=pltpu.PrefetchScalarGridSpec(
                num_scalar_prefetch=0,
                grid=(grid_m,),
                in_specs=in_specs,
                out_specs=pl.BlockSpec((tile_m_eff, out_size), lambda i: (i, 0)),
            ),
            compiler_params=pltpu.CompilerParams(
                dimension_semantics=("parallel",),      # megacore-shardable row axis
                vmem_limit_bytes=vmem_limit),
            cost_estimate=cost,
        )(x2d, *[a for wb in zip(weights, biases_2d) for a in wb])

    try:
        out2d = run(True)
    except Exception:
        # Fallback if this Pallas/Mosaic build does not accept
        # pipeline_mode=pl.Buffered(1) on pallas_call BlockSpecs; buffering is
        # a pure VMEM-footprint optimization and never changes results.
        out2d = run(False)

    return out2d.reshape(lead_shape + tuple(out_shape))


def mlp_reference(x, weights, biases, out_shape, use_non_linear_output=False):
    h = x.reshape(-1, x.shape[-1])
    for l, (w, b) in enumerate(zip(weights, biases)):
        h = h @ w + b
        if (l != len(weights) - 1) or use_non_linear_output:
            h = jnp.maximum(h, 0.0)
    return h.reshape(x.shape[:-1] + tuple(out_shape))


def init_mlp_params(key, in_size, hidden_sizes, out_size):
    """Deterministic init matching the layer shapes of the PyTorch MLP.

    PyTorch Linear stores weight as (out, in); we keep (in, out) since the
    kernel computes x @ W. Values use uniform(-1/sqrt(in), 1/sqrt(in))."""
    sizes = list(zip([in_size] + hidden_sizes, hidden_sizes + [out_size]))
    weights, biases = [], []
    for (i, o) in sizes:
        key, kw, kb = jax.random.split(key, 3)
        bound = 1.0 / math.sqrt(i)
        weights.append(jax.random.uniform(kw, (i, o), jnp.float32, -bound, bound))
        biases.append(jax.random.uniform(kb, (o,), jnp.float32, -bound, bound))
    return weights, biases


if __name__ == "__main__":
    key = jax.random.PRNGKey(0)

    # module config: MLP(in_size=16, out_size=8, hidden_sizes=[32, 32], out_shape=(2, 4))
    in_size, out_size = 16, 8
    hidden_sizes = [32, 32]
    out_shape = (2, 4)          # prod(out_shape) == out_size
    use_non_linear_output = False

    key, kx, kp = jax.random.split(key, 3)
    weights, biases = init_mlp_params(kp, in_size, hidden_sizes, out_size)

    # --- Test A: small shape (batch=2, seq=8), tile shrinks to fit exactly ---
    x_small = jax.random.normal(kx, (2, 8, in_size), jnp.float32)
    y = jax.block_until_ready(
        mlp_pallas(x_small, weights, biases, out_shape, use_non_linear_output))
    y_ref = mlp_reference(x_small, weights, biases, out_shape, use_non_linear_output)
    assert y.shape == x_small.shape[:-1] + out_shape, y.shape
    assert jnp.allclose(y, y_ref, atol=2e-5, rtol=2e-5), "mismatch vs reference (small)"

    # --- Test B: larger M with a ragged tail (M=1200, tile_m=512, grid=3) ---
    # Exercises the big MXU-aligned tile and Pallas' masked edge-block write
    # (no wrapper-side padding copy of x).
    key, kx2 = jax.random.split(key)
    x_big = jax.random.normal(kx2, (4, 300, in_size), jnp.float32)
    y2 = jax.block_until_ready(
        mlp_pallas(x_big, weights, biases, out_shape, use_non_linear_output, tile_m=512))
    y2_ref = mlp_reference(x_big, weights, biases, out_shape, use_non_linear_output)
    assert y2.shape == x_big.shape[:-1] + out_shape, y2.shape
    assert jnp.allclose(y2, y2_ref, atol=2e-5, rtol=2e-5), "mismatch vs reference (big)"

    # --- Test C: bf16 weight path (bf16 MXU feeds, f32 accumulation) ---
    y3 = jax.block_until_ready(
        mlp_pallas(x_small, weights, biases, out_shape, use_non_linear_output,
                   param_dtype=jnp.bfloat16))
    assert jnp.allclose(y3, y_ref, atol=7e-2, rtol=7e-2), "mismatch vs reference (bf16)"

    print("KERNEL_OK")
</pallas_src>

<mosaic_0001>
module attributes {stable_mosaic.version = 11 : i64} {
  func.func @kernel(%arg0: i32, %arg1: memref<16x16xf32, #tpu.memory_space<vmem>>, %arg2: memref<16x32xf32, #tpu.memory_space<vmem>>, %arg3: memref<1x32xf32, #tpu.memory_space<vmem>>, %arg4: memref<32x32xf32, #tpu.memory_space<vmem>>, %arg5: memref<1x32xf32, #tpu.memory_space<vmem>>, %arg6: memref<32x8xf32, #tpu.memory_space<vmem>>, %arg7: memref<1x8xf32, #tpu.memory_space<vmem>>, %arg8: memref<16x8xf32, #tpu.memory_space<vmem>>) attributes {dimension_semantics = [#tpu.dimension_semantics<parallel>], iteration_bounds = array<i64: 1>, scalar_prefetch = 0 : i64, scratch_operands = 0 : i64, tpu.core_type = #tpu.core_type<tc>, window_params = [{transform_indices = @transform_0, window_bounds = array<i64: 16, 16>}, {pipeline_mode = #tpu.pipeline_mode<synchronous>, transform_indices = @transform_1, window_bounds = array<i64: 16, 32>}, {pipeline_mode = #tpu.pipeline_mode<synchronous>, transform_indices = @transform_2, window_bounds = array<i64: 1, 32>}, {pipeline_mode = #tpu.pipeline_mode<synchronous>, transform_indices = @transform_3, window_bounds = array<i64: 32, 32>}, {pipeline_mode = #tpu.pipeline_mode<synchronous>, transform_indices = @transform_4, window_bounds = array<i64: 1, 32>}, {pipeline_mode = #tpu.pipeline_mode<synchronous>, transform_indices = @transform_5, window_bounds = array<i64: 32, 8>}, {pipeline_mode = #tpu.pipeline_mode<synchronous>, transform_indices = @transform_6, window_bounds = array<i64: 1, 8>}, {transform_indices = @transform_7, window_bounds = array<i64: 16, 8>}]} {
    %c0 = arith.constant 0 : index
    %c0_0 = arith.constant 0 : index
    %0 = vector.load %arg1[%c0, %c0_0] : memref<16x16xf32, #tpu.memory_space<vmem>>, vector<16x16xf32>
    %c0_1 = arith.constant 0 : index
    %c0_2 = arith.constant 0 : index
    %1 = vector.load %arg2[%c0_1, %c0_2] : memref<16x32xf32, #tpu.memory_space<vmem>>, vector<16x32xf32>
    %c0_3 = arith.constant 0 : index
    %c0_4 = arith.constant 0 : index
    %2 = vector.load %arg3[%c0_3, %c0_4] : memref<1x32xf32, #tpu.memory_space<vmem>>, vector<1x32xf32>
    %cst = arith.constant dense<0.000000e+00> : vector<16x32xf32>
    %3 = tpu.matmul %0, %1, %cst {dimension_numbers = #tpu.dot_dimension_numbers<[1], [0], [0], [1], [0, 0, 1, 1], [], []>} : vector<16x16xf32>, vector<16x32xf32>, vector<16x32xf32> -> vector<16x32xf32>
    %4 = vector.broadcast %2 : vector<1x32xf32> to vector<16x32xf32>
    %5 = arith.addf %3, %4 : vector<16x32xf32>
    %cst_5 = arith.constant 0.000000e+00 : f32
    %6 = vector.broadcast %cst_5 : f32 to vector<16x32xf32>
    %7 = arith.maximumf %5, %6 : vector<16x32xf32>
    %c0_6 = arith.constant 0 : index
    %c0_7 = arith.constant 0 : index
    %8 = vector.load %arg4[%c0_6, %c0_7] : memref<32x32xf32, #tpu.memory_space<vmem>>, vector<32x32xf32>
    %c0_8 = arith.constant 0 : index
    %c0_9 = arith.constant 0 : index
    %9 = vector.load %arg5[%c0_8, %c0_9] : memref<1x32xf32, #tpu.memory_space<vmem>>, vector<1x32xf32>
    %cst_10 = arith.constant dense<0.000000e+00> : vector<16x32xf32>
    %10 = tpu.matmul %7, %8, %cst_10 {dimension_numbers = #tpu.dot_dimension_numbers<[1], [0], [0], [1], [0, 0, 1, 1], [], []>} : vector<16x32xf32>, vector<32x32xf32>, vector<16x32xf32> -> vector<16x32xf32>
    %11 = vector.broadcast %9 : vector<1x32xf32> to vector<16x32xf32>
    %12 = arith.addf %10, %11 : vector<16x32xf32>
    %cst_11 = arith.constant 0.000000e+00 : f32
    %13 = vector.broadcast %cst_11 : f32 to vector<16x32xf32>
    %14 = arith.maximumf %12, %13 : vector<16x32xf32>
    %c0_12 = arith.constant 0 : index
    %c0_13 = arith.constant 0 : index
    %15 = vector.load %arg6[%c0_12, %c0_13] : memref<32x8xf32, #tpu.memory_space<vmem>>, vector<32x8xf32>
    %c0_14 = arith.constant 0 : index
    %c0_15 = arith.constant 0 : index
    %16 = vector.load %arg7[%c0_14, %c0_15] : memref<1x8xf32, #tpu.memory_space<vmem>>, vector<1x8xf32>
    %cst_16 = arith.constant dense<0.000000e+00> : vector<16x8xf32>
    %17 = tpu.matmul %14, %15, %cst_16 {dimension_numbers = #tpu.dot_dimension_numbers<[1], [0], [0], [1], [0, 0, 1, 1], [], []>} : vector<16x32xf32>, vector<32x8xf32>, vector<16x8xf32> -> vector<16x8xf32>
    %18 = vector.broadcast %16 : vector<1x8xf32> to vector<16x8xf32>
    %19 = arith.addf %17, %18 : vector<16x8xf32>
    %c0_17 = arith.constant 0 : index
    %c0_18 = arith.constant 0 : index
    %20 = vector.load %arg8[%c0_17, %c0_18] : memref<16x8xf32, #tpu.memory_space<vmem>>, vector<16x8xf32>
    tpu.vector_store %arg8[%c0_17, %c0_18], %19 {strides = array<i32>} : memref<16x8xf32, #tpu.memory_space<vmem>>, vector<16x8xf32>,
    return
  }
  func.func @transform_0(%arg0: i32) -> (i32, i32) {
    %c0_i32 = arith.constant 0 : i32
    %c0_i32_0 = arith.constant 0 : i32
    return %arg0, %c0_i32 : i32, i32
  }
  func.func @transform_1(%arg0: i32) -> (i32, i32) {
    %c0_i32 = arith.constant 0 : i32
    %c0_i32_0 = arith.constant 0 : i32
    %c0_i32_1 = arith.constant 0 : i32
    return %c0_i32, %c0_i32_0 : i32, i32
  }
  func.func @transform_2(%arg0: i32) -> (i32, i32) {
    %c0_i32 = arith.constant 0 : i32
    %c0_i32_0 = arith.constant 0 : i32
    %c0_i32_1 = arith.constant 0 : i32
    return %c0_i32, %c0_i32_0 : i32, i32
  }
  func.func @transform_3(%arg0: i32) -> (i32, i32) {
    %c0_i32 = arith.constant 0 : i32
    %c0_i32_0 = arith.constant 0 : i32
    %c0_i32_1 = arith.constant 0 : i32
    return %c0_i32, %c0_i32_0 : i32, i32
  }
  func.func @transform_4(%arg0: i32) -> (i32, i32) {
    %c0_i32 = arith.constant 0 : i32
    %c0_i32_0 = arith.constant 0 : i32
    %c0_i32_1 = arith.constant 0 : i32
    return %c0_i32, %c0_i32_0 : i32, i32
  }
  func.func @transform_5(%arg0: i32) -> (i32, i32) {
    %c0_i32 = arith.constant 0 : i32
    %c0_i32_0 = arith.constant 0 : i32
    %c0_i32_1 = arith.constant 0 : i32
    return %c0_i32, %c0_i32_0 : i32, i32
  }
  func.func @transform_6(%arg0: i32) -> (i32, i32) {
    %c0_i32 = arith.constant 0 : i32
    %c0_i32_0 = arith.constant 0 : i32
    %c0_i32_1 = arith.constant 0 : i32
    return %c0_i32, %c0_i32_0 : i32, i32
  }
  func.func @transform_7(%arg0: i32) -> (i32, i32) {
    %c0_i32 = arith.constant 0 : i32
    %c0_i32_0 = arith.constant 0 : i32
    return %arg0, %c0_i32 : i32, i32
  }
}

module attributes {stable_mosaic.version = 11 : i64} {
  func.func @kernel(%arg0: i32, %arg1: memref<16x16xf32, #tpu.memory_space<vmem>>, %arg2: memref<16x32xf32, #tpu.memory_space<vmem>>, %arg3: memref<1x32xf32, #tpu.memory_space<vmem>>, %arg4: memref<32x32xf32, #tpu.memory_space<vmem>>, %arg5: memref<1x32xf32, #tpu.memory_space<vmem>>, %arg6: memref<32x8xf32, #tpu.memory_space<vmem>>, %arg7: memref<1x8xf32, #tpu.memory_space<vmem>>, %arg8: memref<16x8xf32, #tpu.memory_space<vmem>>) attributes {dimension_semantics = [#tpu.dimension_semantics<parallel>], iteration_bounds = array<i64: 1>, scalar_prefetch = 0 : i64, scratch_operands = 0 : i64, tpu.core_type = #tpu.core_type<tc>, window_params = [{transform_indices = @transform_0, window_bounds = array<i64: 16, 16>}, {pipeline_mode = #tpu.pipeline_mode<synchronous>, transform_indices = @transform_1, window_bounds = array<i64: 16, 32>}, {pipeline_mode = #tpu.pipeline_mode<synchronous>, transform_indices = @transform_2, window_bounds = array<i64: 1, 32>}, {pipeline_mode = #tpu.pipeline_mode<synchronous>, transform_indices = @transform_3, window_bounds = array<i64: 32, 32>}, {pipeline_mode = #tpu.pipeline_mode<synchronous>, transform_indices = @transform_4, window_bounds = array<i64: 1, 32>}, {pipeline_mode = #tpu.pipeline_mode<synchronous>, transform_indices = @transform_5, window_bounds = array<i64: 32, 8>}, {pipeline_mode = #tpu.pipeline_mode<synchronous>, transform_indices = @transform_6, window_bounds = array<i64: 1, 8>}, {transform_indices = @transform_7, window_bounds = array<i64: 16, 8>}]} {
    %c0 = arith.constant 0 : index
    %c0_0 = arith.constant 0 : index
    %0 = vector.load %arg1[%c0, %c0_0] : memref<16x16xf32, #tpu.memory_space<vmem>>, vector<16x16xf32>
    %c0_1 = arith.constant 0 : index
    %c0_2 = arith.constant 0 : index
    %1 = vector.load %arg2[%c0_1, %c0_2] : memref<16x32xf32, #tpu.memory_space<vmem>>, vector<16x32xf32>
    %c0_3 = arith.constant 0 : index
    %c0_4 = arith.constant 0 : index
    %2 = vector.load %arg3[%c0_3, %c0_4] : memref<1x32xf32, #tpu.memory_space<vmem>>, vector<1x32xf32>
    %cst = arith.constant dense<0.000000e+00> : vector<16x32xf32>
    %3 = tpu.matmul %0, %1, %cst {dimension_numbers = #tpu.dot_dimension_numbers<[1], [0], [0], [1], [0, 0, 1, 1], [], []>} : vector<16x16xf32>, vector<16x32xf32>, vector<16x32xf32> -> vector<16x32xf32>
    %4 = vector.broadcast %2 : vector<1x32xf32> to vector<16x32xf32>
    %5 = arith.addf %3, %4 : vector<16x32xf32>
    %cst_5 = arith.constant 0.000000e+00 : f32
    %6 = vector.broadcast %cst_5 : f32 to vector<16x32xf32>
    %7 = arith.maximumf %5, %6 : vector<16x32xf32>
    %c0_6 = arith.constant 0 : index
    %c0_7 = arith.constant 0 : index
    %8 = vector.load %arg4[%c0_6, %c0_7] : memref<32x32xf32, #tpu.memory_space<vmem>>, vector<32x32xf32>
    %c0_8 = arith.constant 0 : index
    %c0_9 = arith.constant 0 : index
    %9 = vector.load %arg5[%c0_8, %c0_9] : memref<1x32xf32, #tpu.memory_space<vmem>>, vector<1x32xf32>
    %cst_10 = arith.constant dense<0.000000e+00> : vector<16x32xf32>
    %10 = tpu.matmul %7, %8, %cst_10 {dimension_numbers = #tpu.dot_dimension_numbers<[1], [0], [0], [1], [0, 0, 1, 1], [], []>} : vector<16x32xf32>, vector<32x32xf32>, vector<16x32xf32> -> vector<16x32xf32>
    %11 = vector.broadcast %9 : vector<1x32xf32> to vector<16x32xf32>
    %12 = arith.addf %10, %11 : vector<16x32xf32>
    %cst_11 = arith.constant 0.000000e+00 : f32
    %13 = vector.broadcast %cst_11 : f32 to vector<16x32xf32>
    %14 = arith.maximumf %12, %13 : vector<16x32xf32>
    %c0_12 = arith.constant 0 : index
    %c0_13 = arith.constant 0 : index
    %15 = vector.load %arg6[%c0_12, %c0_13] : memref<32x8xf32, #tpu.memory_space<vmem>>, vector<32x8xf32>
    %c0_14 = arith.constant 0 : index
    %c0_15 = arith.constant 0 : index
    %16 = vector.load %arg7[%c0_14, %c0_15] : memref<1x8xf32, #tpu.memory_space<vmem>>, vector<1x8xf32>
    %cst_16 = arith.constant dense<0.000000e+00> : vector<16x8xf32>
    %17 = tpu.matmul %14, %15, %cst_16 {dimension_numbers = #tpu.dot_dimension_numbers<[1], [0], [0], [1], [0, 0, 1, 1], [], []>} : vector<16x32xf32>, vector<32x8xf32>, vector<16x8xf32> -> vector<16x8xf32>
    %18 = vector.broadcast %16 : vector<1x8xf32> to vector<16x8xf32>
    %19 = arith.addf %17, %18 : vector<16x8xf32>
    %c0_17 = arith.constant 0 : index
    %c0_18 = arith.constant 0 : index
    %20 = vector.load %arg8[%c0_17, %c0_18] : memref<16x8xf32, #tpu.memory_space<vmem>>, vector<16x8xf32>
    tpu.vector_store %arg8[%c0_17, %c0_18], %19 {strides = array<i32>} : memref<16x8xf32, #tpu.memory_space<vmem>>, vector<16x8xf32>,
    return
  }
  func.func @transform_0(%arg0: i32) -> (i32, i32) {
    %c0_i32 = arith.constant 0 : i32
    %c0_i32_0 = arith.constant 0 : i32
    return %arg0, %c0_i32 : i32, i32
  }
  func.func @transform_1(%arg0: i32) -> (i32, i32) {
    %c0_i32 = arith.constant 0 : i32
    %c0_i32_0 = arith.constant 0 : i32
    %c0_i32_1 = arith.constant 0 : i32
    return %c0_i32, %c0_i32_0 : i32, i32
  }
  func.func @transform_2(%arg0: i32) -> (i32, i32) {
    %c0_i32 = arith.constant 0 : i32
    %c0_i32_0 = arith.constant 0 : i32
    %c0_i32_1 = arith.constant 0 : i32
    return %c0_i32, %c0_i32_0 : i32, i32
  }
  func.func @transform_3(%arg0: i32) -> (i32, i32) {
    %c0_i32 = arith.constant 0 : i32
    %c0_i32_0 = arith.constant 0 : i32
    %c0_i32_1 = arith.constant 0 : i32
    return %c0_i32, %c0_i32_0 : i32, i32
  }
  func.func @transform_4(%arg0: i32) -> (i32, i32) {
    %c0_i32 = arith.constant 0 : i32
    %c0_i32_0 = arith.constant 0 : i32
    %c0_i32_1 = arith.constant 0 : i32
    return %c0_i32, %c0_i32_0 : i32, i32
  }
  func.func @transform_5(%arg0: i32) -> (i32, i32) {
    %c0_i32 = arith.constant 0 : i32
    %c0_i32_0 = arith.constant 0 : i32
    %c0_i32_1 = arith.constant 0 : i32
    return %c0_i32, %c0_i32_0 : i32, i32
  }
  func.func @transform_6(%arg0: i32) -> (i32, i32) {
    %c0_i32 = arith.constant 0 : i32
    %c0_i32_0 = arith.constant 0 : i32
    %c0_i32_1 = arith.constant 0 : i32
    return %c0_i32, %c0_i32_0 : i32, i32
  }
  func.func @transform_7(%arg0: i32) -> (i32, i32) {
    %c0_i32 = arith.constant 0 : i32
    %c0_i32_0 = arith.constant 0 : i32
    return %arg0, %c0_i32 : i32, i32
  }
}

</mosaic_0001>

<llo_original>
// kernel: tpu_custom_call.1
$region0: #{tpu_custom_call.1}
  #allocation0 [shape = 'u32[]', space=smem, size = 0x4, offset = 0x4, fixed_abs, tag = 'smem constant byte address 0x4 - core index']
  #allocation1 [shape = 'u32[72,128]{1,0:T(1,128)}', space=vmem, size = 0x9000, scoped, tag = 'internal scratch']
  %s0 = inlined_call_operand.hbm [shape: f32[16,16], index: 0, kind: input, shape index: {}]
  %s1 = inlined_call_operand.hbm [shape: f32[16,32], index: 1, kind: input, shape index: {}]
  %s2 = inlined_call_operand.vmem [shape: f32[1,32], index: 2, kind: input, shape index: {}]
  %s3 = inlined_call_operand.vmem [shape: f32[32,32], index: 3, kind: input, shape index: {}]
  %s4 = inlined_call_operand.vmem [shape: f32[1,32], index: 4, kind: input, shape index: {}]
  %s5 = inlined_call_operand.vmem [shape: f32[32,8], index: 5, kind: input, shape index: {}]
  %s6 = inlined_call_operand.vmem [shape: f32[1,8], index: 6, kind: input, shape index: {}]
  %s7 = inlined_call_operand.vmem [shape: f32[16,8], index: 7, kind: output, shape index: {}]
  %s8 = sld [smem:[#allocation0]]
  $region46: #{tpu_custom_call.1} parent=0
    _
  %s10 = ssub.s32 1, %s8
  %s11 = scalar_select 0, %s10, %s8
  $region1: #{tpu_custom_call.1} parent=0
    #allocation2 [shape = 'u8[8192]{0}', space=vmem, size = 0x2000, scoped, tag = 'input window, operand 0, single buffered']
    #allocation3 [shape = 's32[1]{0}', space=sflag, size = 0x4, scoped, tag = 'scoped memory for tpu_custom_call.1']
    #allocation4 [shape = 'u8[8192]{0}', space=vmem, size = 0x2000, scoped, tag = 'input window, operand 1, single buffered']
    #allocation5 [shape = 's32[1]{0}', space=sflag, size = 0x4, scoped, tag = 'scoped memory for tpu_custom_call.1']
    %12 = vsyncpa [#allocation3], 0
    %13 = vsyncpa [#allocation5], 0
    // Predicated region
    $region2: #{tpu_custom_call.1} parent=1 // pred_check
      _
    $region3: #{tpu_custom_call.1} parent=1 // pred_check_branch
      %15 = sbr.rel (0) target = $region5
    $region4: #{tpu_custom_call.1} parent=1 // pred_region
      %17 = vsyncadd [#allocation3], 0
      %s18 = sshll.u32 %s0, 4
      %s19 = int_to_ptr.hbm [resolvable:$true] %s18
      %s20 = sshll.u32 [#allocation2], 4
      %s21 = int_to_ptr.vmem [resolvable:$true] %s20
      %26 = dma.hbm_to_vmem [thread:$0]  %s19, 256, %s21, [#allocation3], 128, 128, 8
    $region5: #{tpu_custom_call.1} parent=1 // pred_fallthru
      _
    // Predicated region
    $region6: #{tpu_custom_call.1} parent=1 // pred_check
      _
    $region7: #{tpu_custom_call.1} parent=1 // pred_check_branch
      %28 = sbr.rel (0) target = $region9
    $region8: #{tpu_custom_call.1} parent=1 // pred_region
      %30 = vsyncadd [#allocation5], 0
      %s31 = sshll.u32 %s1, 4
      %s32 = int_to_ptr.hbm [resolvable:$true] %s31
      %s33 = sshll.u32 [#allocation4], 4
      %s34 = int_to_ptr.vmem [resolvable:$true] %s33
      %39 = dma.hbm_to_vmem [thread:$0]  %s32, 256, %s34, [#allocation5], 128, 128, 8
    $region9: #{tpu_custom_call.1} parent=1 // pred_fallthru
      _
    // Predicated region
    $region10: #{tpu_custom_call.1} parent=1 // pred_check
      _
    $region11: #{tpu_custom_call.1} parent=1 // pred_check_branch
      %41 = sbr.rel (0) target = $region13
    $region12: #{tpu_custom_call.1} parent=1 // pred_region
      _
    $region13: #{tpu_custom_call.1} parent=1 // pred_fallthru
      _
    // Predicated region
    $region14: #{tpu_custom_call.1} parent=1 // pred_check
      _
    $region15: #{tpu_custom_call.1} parent=1 // pred_check_branch
      %43 = sbr.rel (0) target = $region17
    $region16: #{tpu_custom_call.1} parent=1 // pred_region
      _
    $region17: #{tpu_custom_call.1} parent=1 // pred_fallthru
      _
    // Predicated region
    $region18: #{tpu_custom_call.1} parent=1 // pred_check
      _
    $region19: #{tpu_custom_call.1} parent=1 // pred_check_branch
      %45 = sbr.rel (0) target = $region21
    $region20: #{tpu_custom_call.1} parent=1 // pred_region
      _
    $region21: #{tpu_custom_call.1} parent=1 // pred_fallthru
      _
    // Predicated region
    $region22: #{tpu_custom_call.1} parent=1 // pred_check
      _
    $region23: #{tpu_custom_call.1} parent=1 // pred_check_branch
      %47 = sbr.rel (0) target = $region25
    $region24: #{tpu_custom_call.1} parent=1 // pred_region
      _
    $region25: #{tpu_custom_call.1} parent=1 // pred_fallthru
      _
    // Predicated region
    $region26: #{tpu_custom_call.1} parent=1 // pred_check
      _
    $region27: #{tpu_custom_call.1} parent=1 // pred_check_branch
      %49 = sbr.rel (0) target = $region29
    $region28: #{tpu_custom_call.1} parent=1 // pred_region
      _
    $region29: #{tpu_custom_call.1} parent=1 // pred_fallthru
      _
    // Predicated region
    $region30: #{tpu_custom_call.1} parent=1 // pred_check
      _
    $region31: #{tpu_custom_call.1} parent=1 // pred_check_branch
      %51 = sbr.rel (0) target = $region33
    $region32: #{tpu_custom_call.1} parent=1 // pred_region
      %53 = dma.done [#allocation3], 256
    $region33: #{tpu_custom_call.1} parent=1 // pred_fallthru
      _
    // Predicated region
    $region34: #{tpu_custom_call.1} parent=1 // pred_check
      _
    $region35: #{tpu_custom_call.1} parent=1 // pred_check_branch
      %55 = sbr.rel (0) target = $region37
    $region36: #{tpu_custom_call.1} parent=1 // pred_region
      %57 = dma.done [#allocation5], 256
    $region37: #{tpu_custom_call.1} parent=1 // pred_fallthru
      _
    %v58 = vld [vmem:[#allocation2] sm:$0xff]
    %v59 = vld [vmem:[#allocation2 + $0x8] sm:$0xff]
    %v60 = vld [vmem:[#allocation4] sm:$0xff]
    %v61 = vld [vmem:[#allocation4 + $0x8] sm:$0xff]
    %v62 = vld [vmem:[%s2] sm:$0x1]
    %v64 = vperm.slane %v62, 0
    %vm66 = vcmask 130048
    %v68 = vsel %vm66, %v58, 0
    %v71 = vsel %vm66, %v59, 0
    %73 = vmatpush.msra.mxu0 0.0
    %74 = vmatpush.msra.mxu0 0.0
    %75 = vmatpush.msra.mxu0 0.0
    %76 = vmatpush.msra.mxu0 0.0
    %77 = vmatpush.msra.mxu0 0.0
    %78 = vmatpush.msra.mxu0 0.0
    %79 = vmatpush.msra.mxu0 0.0
    %80 = vmatpush.msra.mxu0 0.0
    %81 = vmatpush.msra.mxu0 0.0
    %82 = vmatpush.msra.mxu0 0.0
    %83 = vmatpush.msra.mxu0 0.0
    %84 = vmatpush.msra.mxu0 0.0
    %85 = vmatpush.msra.mxu0 0.0
    %86 = vmatpush.msra.mxu0 0.0
    %87 = vmatpush.msra.mxu0 %v61
    %88 = vmatpush.msra.mxu0 %v60
    %89 = vmatmul.f32.gmra.mxu0 %v68
    %v90 = vpop.f32.mrf.mxu0
    %v91 = vadd.f32 %v64, %v90
    %92 = vmatmul.f32.gmra.mxu0 %v71
    %v93 = vpop.f32.mrf.mxu0
    %v94 = vadd.f32 %v64, %v93
    %95 = vdwg.mxu0
    %v96 = vmax.f32 %v91, 0.0
    %v97 = vmax.f32 %v94, 0.0
    %v98 = vld [vmem:[%s3] sm:$0xff]
    %v99 = vld [vmem:[%s3 + $0x8] sm:$0xff]
    %v100 = vld [vmem:[%s3 + $0x10] sm:$0xff]
    %v101 = vld [vmem:[%s3 + $0x18] sm:$0xff]
    %v102 = vld [vmem:[%s4] sm:$0x1]
    %v104 = vperm.slane %v102, 0
    %vm106 = vcmask 261120
    %v108 = vsel %vm106, %v96, 0
    %v111 = vsel %vm106, %v97, 0
    %113 = vmatpush.msra.mxu0 0.0
    %114 = vmatpush.msra.mxu0 0.0
    %115 = vmatpush.msra.mxu0 0.0
    %116 = vmatpush.msra.mxu0 0.0
    %117 = vmatpush.msra.mxu0 0.0
    %118 = vmatpush.msra.mxu0 0.0
    %119 = vmatpush.msra.mxu0 0.0
    %120 = vmatpush.msra.mxu0 0.0
    %121 = vmatpush.msra.mxu0 0.0
    %122 = vmatpush.msra.mxu0 0.0
    %123 = vmatpush.msra.mxu0 0.0
    %124 = vmatpush.msra.mxu0 0.0
    %125 = vmatpush.msra.mxu0 %v101
    %126 = vmatpush.msra.mxu0 %v100
    %127 = vmatpush.msra.mxu0 %v99
    %128 = vmatpush.msra.mxu0 %v98
    %129 = vmatmul.f32.gmra.mxu0 %v108
    %v130 = vpop.f32.mrf.mxu0
    %v131 = vadd.f32 %v104, %v130
    %132 = vmatmul.f32.gmra.mxu0 %v111
    %v133 = vpop.f32.mrf.mxu0
    %v134 = vadd.f32 %v104, %v133
    %135 = vdwg.mxu0
    %v136 = vmax.f32 %v131, 0.0
    %v137 = vmax.f32 %v134, 0.0
    %v138 = vld [vmem:[%s5] sm:$0xff]
    %v139 = vld [vmem:[%s5 + $0x8] sm:$0xff]
    %v140 = vld [vmem:[%s5 + $0x10] sm:$0xff]
    %v141 = vld [vmem:[%s5 + $0x18] sm:$0xff]
    %v142 = vld [vmem:[%s6] sm:$0x1]
    %v144 = vperm.slane %v142, 0
    %v147 = vsel %vm106, %v136, 0
    %v150 = vsel %vm106, %v137, 0
    %152 = vmatpush.msra.mxu0 0.0
    %153 = vmatpush.msra.mxu0 0.0
    %154 = vmatpush.msra.mxu0 0.0
    %155 = vmatpush.msra.mxu0 0.0
    %156 = vmatpush.msra.mxu0 0.0
    %157 = vmatpush.msra.mxu0 0.0
    %158 = vmatpush.msra.mxu0 0.0
    %159 = vmatpush.msra.mxu0 0.0
    %160 = vmatpush.msra.mxu0 0.0
    %161 = vmatpush.msra.mxu0 0.0
    %162 = vmatpush.msra.mxu0 0.0
    %163 = vmatpush.msra.mxu0 0.0
    %164 = vmatpush.msra.mxu0 %v141
    %165 = vmatpush.msra.mxu0 %v140
    %166 = vmatpush.msra.mxu0 %v139
    %167 = vmatpush.msra.mxu0 %v138
    %168 = vmatmul.f32.gmra.mxu0 %v147
    %v169 = vpop.f32.mrf.mxu0
    %v170 = vadd.f32 %v144, %v169
    %171 = vmatmul.f32.gmra.mxu0 %v150
    %v172 = vpop.f32.mrf.mxu0
    %v173 = vadd.f32 %v144, %v172
    %174 = vdwg.mxu0
    %vm175 = vcmask 64512
    %176 = vst.msk [vmem:[%s7] sm:$0xff] %vm175, %v170
    %177 = vst.msk [vmem:[%s7 + $0x8] sm:$0xff] %vm175, %v173
    // Predicated region
    $region38: #{tpu_custom_call.1} parent=1 // pred_check
      _
    $region39: #{tpu_custom_call.1} parent=1 // pred_check_branch
      %179 = sbr.rel (0) target = $region41
    $region40: #{tpu_custom_call.1} parent=1 // pred_region
      _
    $region41: #{tpu_custom_call.1} parent=1 // pred_fallthru
      _
    // Predicated region
    $region42: #{tpu_custom_call.1} parent=1 // pred_check
      _
    $region43: #{tpu_custom_call.1} parent=1 // pred_check_branch
      %181 = sbr.rel (0) target = $region45
    $region44: #{tpu_custom_call.1} parent=1 // pred_region
      _
    $region45: #{tpu_custom_call.1} parent=1 // pred_fallthru
      _
    %182 = vsyncpa [#allocation3], 1
    %183 = vsyncpa [#allocation5], 1

// kernel: tpu_custom_call.1
$region0: #{tpu_custom_call.1}
  #allocation0 [shape = 'u32[]', space=smem, size = 0x4, offset = 0x4, fixed_abs, tag = 'smem constant byte address 0x4 - core index']
  #allocation1 [shape = 'u32[72,128]{1,0:T(1,128)}', space=vmem, size = 0x9000, scoped, tag = 'internal scratch']
  %s0 = inlined_call_operand.hbm [shape: f32[16,16], index: 0, kind: input, shape index: {}]
  %s1 = inlined_call_operand.hbm [shape: f32[16,32], index: 1, kind: input, shape index: {}]
  %s2 = inlined_call_operand.vmem [shape: f32[1,32], index: 2, kind: input, shape index: {}]
  %s3 = inlined_call_operand.vmem [shape: f32[32,32], index: 3, kind: input, shape index: {}]
  %s4 = inlined_call_operand.vmem [shape: f32[1,32], index: 4, kind: input, shape index: {}]
  %s5 = inlined_call_operand.vmem [shape: f32[32,8], index: 5, kind: input, shape index: {}]
  %s6 = inlined_call_operand.vmem [shape: f32[1,8], index: 6, kind: input, shape index: {}]
  %s7 = inlined_call_operand.vmem [shape: f32[16,8], index: 7, kind: output, shape index: {}]
  %s8 = sld [smem:[#allocation0]]
  $region46: #{tpu_custom_call.1} parent=0
    _
  %s10 = ssub.s32 1, %s8
  %s11 = scalar_select 0, %s10, %s8
  $region1: #{tpu_custom_call.1} parent=0
    #allocation2 [shape = 'u8[8192]{0}', space=vmem, size = 0x2000, scoped, tag = 'input window, operand 0, single buffered']
    #allocation3 [shape = 's32[1]{0}', space=sflag, size = 0x4, scoped, tag = 'scoped memory for tpu_custom_call.1']
    #allocation4 [shape = 'u8[8192]{0}', space=vmem, size = 0x2000, scoped, tag = 'input window, operand 1, single buffered']
    #allocation5 [shape = 's32[1]{0}', space=sflag, size = 0x4, scoped, tag = 'scoped memory for tpu_custom_call.1']
    %12 = vsyncpa [#allocation3], 0
    %13 = vsyncpa [#allocation5], 0
    // Predicated region
    $region2: #{tpu_custom_call.1} parent=1 // pred_check
      _
    $region3: #{tpu_custom_call.1} parent=1 // pred_check_branch
      %15 = sbr.rel (0) target = $region5
    $region4: #{tpu_custom_call.1} parent=1 // pred_region
      %17 = vsyncadd [#allocation3], 0
      %s18 = sshll.u32 %s0, 4
      %s19 = int_to_ptr.hbm [resolvable:$true] %s18
      %s20 = sshll.u32 [#allocation2], 4
      %s21 = int_to_ptr.vmem [resolvable:$true] %s20
      %26 = dma.hbm_to_vmem [thread:$0]  %s19, 256, %s21, [#allocation3], 128, 128, 8
    $region5: #{tpu_custom_call.1} parent=1 // pred_fallthru
      _
    // Predicated region
    $region6: #{tpu_custom_call.1} parent=1 // pred_check
      _
    $region7: #{tpu_custom_call.1} parent=1 // pred_check_branch
      %28 = sbr.rel (0) target = $region9
    $region8: #{tpu_custom_call.1} parent=1 // pred_region
      %30 = vsyncadd [#allocation5], 0
      %s31 = sshll.u32 %s1, 4
      %s32 = int_to_ptr.hbm [resolvable:$true] %s31
      %s33 = sshll.u32 [#allocation4], 4
      %s34 = int_to_ptr.vmem [resolvable:$true] %s33
      %39 = dma.hbm_to_vmem [thread:$0]  %s32, 256, %s34, [#allocation5], 128, 128, 8
    $region9: #{tpu_custom_call.1} parent=1 // pred_fallthru
      _
    // Predicated region
    $region10: #{tpu_custom_call.1} parent=1 // pred_check
      _
    $region11: #{tpu_custom_call.1} parent=1 // pred_check_branch
      %41 = sbr.rel (0) target = $region13
    $region12: #{tpu_custom_call.1} parent=1 // pred_region
      _
    $region13: #{tpu_custom_call.1} parent=1 // pred_fallthru
      _
    // Predicated region
    $region14: #{tpu_custom_call.1} parent=1 // pred_check
      _
    $region15: #{tpu_custom_call.1} parent=1 // pred_check_branch
      %43 = sbr.rel (0) target = $region17
    $region16: #{tpu_custom_call.1} parent=1 // pred_region
      _
    $region17: #{tpu_custom_call.1} parent=1 // pred_fallthru
      _
    // Predicated region
    $region18: #{tpu_custom_call.1} parent=1 // pred_check
      _
    $region19: #{tpu_custom_call.1} parent=1 // pred_check_branch
      %45 = sbr.rel (0) target = $region21
    $region20: #{tpu_custom_call.1} parent=1 // pred_region
      _
    $region21: #{tpu_custom_call.1} parent=1 // pred_fallthru
      _
    // Predicated region
    $region22: #{tpu_custom_call.1} parent=1 // pred_check
      _
    $region23: #{tpu_custom_call.1} parent=1 // pred_check_branch
      %47 = sbr.rel (0) target = $region25
    $region24: #{tpu_custom_call.1} parent=1 // pred_region
      _
    $region25: #{tpu_custom_call.1} parent=1 // pred_fallthru
      _
    // Predicated region
    $region26: #{tpu_custom_call.1} parent=1 // pred_check
      _
    $region27: #{tpu_custom_call.1} parent=1 // pred_check_branch
      %49 = sbr.rel (0) target = $region29
    $region28: #{tpu_custom_call.1} parent=1 // pred_region
      _
    $region29: #{tpu_custom_call.1} parent=1 // pred_fallthru
      _
    // Predicated region
    $region30: #{tpu_custom_call.1} parent=1 // pred_check
      _
    $region31: #{tpu_custom_call.1} parent=1 // pred_check_branch
      %51 = sbr.rel (0) target = $region33
    $region32: #{tpu_custom_call.1} parent=1 // pred_region
      %53 = dma.done [#allocation3], 256
    $region33: #{tpu_custom_call.1} parent=1 // pred_fallthru
      _
    // Predicated region
    $region34: #{tpu_custom_call.1} parent=1 // pred_check
      _
    $region35: #{tpu_custom_call.1} parent=1 // pred_check_branch
      %55 = sbr.rel (0) target = $region37
    $region36: #{tpu_custom_call.1} parent=1 // pred_region
      %57 = dma.done [#allocation5], 256
    $region37: #{tpu_custom_call.1} parent=1 // pred_fallthru
      _
    %v58 = vld [vmem:[#allocation2] sm:$0xff]
    %v59 = vld [vmem:[#allocation2 + $0x8] sm:$0xff]
    %v60 = vld [vmem:[#allocation4] sm:$0xff]
    %v61 = vld [vmem:[#allocation4 + $0x8] sm:$0xff]
    %v62 = vld [vmem:[%s2] sm:$0x1]
    %v64 = vperm.slane %v62, 0
    %vm66 = vcmask 130048
    %v68 = vsel %vm66, %v58, 0
    %v71 = vsel %vm66, %v59, 0
    %73 = vmatpush.msra.mxu0 0.0
    %74 = vmatpush.msra.mxu0 0.0
    %75 = vmatpush.msra.mxu0 0.0
    %76 = vmatpush.msra.mxu0 0.0
    %77 = vmatpush.msra.mxu0 0.0
    %78 = vmatpush.msra.mxu0 0.0
    %79 = vmatpush.msra.mxu0 0.0
    %80 = vmatpush.msra.mxu0 0.0
    %81 = vmatpush.msra.mxu0 0.0
    %82 = vmatpush.msra.mxu0 0.0
    %83 = vmatpush.msra.mxu0 0.0
    %84 = vmatpush.msra.mxu0 0.0
    %85 = vmatpush.msra.mxu0 0.0
    %86 = vmatpush.msra.mxu0 0.0
    %87 = vmatpush.msra.mxu0 %v61
    %88 = vmatpush.msra.mxu0 %v60
    %89 = vmatmul.f32.gmra.mxu0 %v68
    %v90 = vpop.f32.mrf.mxu0
    %v91 = vadd.f32 %v64, %v90
    %92 = vmatmul.f32.gmra.mxu0 %v71
    %v93 = vpop.f32.mrf.mxu0
    %v94 = vadd.f32 %v64, %v93
    %95 = vdwg.mxu0
    %v96 = vmax.f32 %v91, 0.0
    %v97 = vmax.f32 %v94, 0.0
    %v98 = vld [vmem:[%s3] sm:$0xff]
    %v99 = vld [vmem:[%s3 + $0x8] sm:$0xff]
    %v100 = vld [vmem:[%s3 + $0x10] sm:$0xff]
    %v101 = vld [vmem:[%s3 + $0x18] sm:$0xff]
    %v102 = vld [vmem:[%s4] sm:$0x1]
    %v104 = vperm.slane %v102, 0
    %vm106 = vcmask 261120
    %v108 = vsel %vm106, %v96, 0
    %v111 = vsel %vm106, %v97, 0
    %113 = vmatpush.msra.mxu0 0.0
    %114 = vmatpush.msra.mxu0 0.0
    %115 = vmatpush.msra.mxu0 0.0
    %116 = vmatpush.msra.mxu0 0.0
    %117 = vmatpush.msra.mxu0 0.0
    %118 = vmatpush.msra.mxu0 0.0
    %119 = vmatpush.msra.mxu0 0.0
    %120 = vmatpush.msra.mxu0 0.0
    %121 = vmatpush.msra.mxu0 0.0
    %122 = vmatpush.msra.mxu0 0.0
    %123 = vmatpush.msra.mxu0 0.0
    %124 = vmatpush.msra.mxu0 0.0
    %125 = vmatpush.msra.mxu0 %v101
    %126 = vmatpush.msra.mxu0 %v100
    %127 = vmatpush.msra.mxu0 %v99
    %128 = vmatpush.msra.mxu0 %v98
    %129 = vmatmul.f32.gmra.mxu0 %v108
    %v130 = vpop.f32.mrf.mxu0
    %v131 = vadd.f32 %v104, %v130
    %132 = vmatmul.f32.gmra.mxu0 %v111
    %v133 = vpop.f32.mrf.mxu0
    %v134 = vadd.f32 %v104, %v133
    %135 = vdwg.mxu0
    %v136 = vmax.f32 %v131, 0.0
    %v137 = vmax.f32 %v134, 0.0
    %v138 = vld [vmem:[%s5] sm:$0xff]
    %v139 = vld [vmem:[%s5 + $0x8] sm:$0xff]
    %v140 = vld [vmem:[%s5 + $0x10] sm:$0xff]
    %v141 = vld [vmem:[%s5 + $0x18] sm:$0xff]
    %v142 = vld [vmem:[%s6] sm:$0x1]
    %v144 = vperm.slane %v142, 0
    %v147 = vsel %vm106, %v136, 0
    %v150 = vsel %vm106, %v137, 0
    %152 = vmatpush.msra.mxu0 0.0
    %153 = vmatpush.msra.mxu0 0.0
    %154 = vmatpush.msra.mxu0 0.0
    %155 = vmatpush.msra.mxu0 0.0
    %156 = vmatpush.msra.mxu0 0.0
    %157 = vmatpush.msra.mxu0 0.0
    %158 = vmatpush.msra.mxu0 0.0
    %159 = vmatpush.msra.mxu0 0.0
    %160 = vmatpush.msra.mxu0 0.0
    %161 = vmatpush.msra.mxu0 0.0
    %162 = vmatpush.msra.mxu0 0.0
    %163 = vmatpush.msra.mxu0 0.0
    %164 = vmatpush.msra.mxu0 %v141
    %165 = vmatpush.msra.mxu0 %v140
    %166 = vmatpush.msra.mxu0 %v139
    %167 = vmatpush.msra.mxu0 %v138
    %168 = vmatmul.f32.gmra.mxu0 %v147
    %v169 = vpop.f32.mrf.mxu0
    %v170 = vadd.f32 %v144, %v169
    %171 = vmatmul.f32.gmra.mxu0 %v150
    %v172 = vpop.f32.mrf.mxu0
    %v173 = vadd.f32 %v144, %v172
    %174 = vdwg.mxu0
    %vm175 = vcmask 64512
    %176 = vst.msk [vmem:[%s7] sm:$0xff] %vm175, %v170
    %177 = vst.msk [vmem:[%s7 + $0x8] sm:$0xff] %vm175, %v173
    // Predicated region
    $region38: #{tpu_custom_call.1} parent=1 // pred_check
      _
    $region39: #{tpu_custom_call.1} parent=1 // pred_check_branch
      %179 = sbr.rel (0) target = $region41
    $region40: #{tpu_custom_call.1} parent=1 // pred_region
      _
    $region41: #{tpu_custom_call.1} parent=1 // pred_fallthru
      _
    // Predicated region
    $region42: #{tpu_custom_call.1} parent=1 // pred_check
      _
    $region43: #{tpu_custom_call.1} parent=1 // pred_check_branch
      %181 = sbr.rel (0) target = $region45
    $region44: #{tpu_custom_call.1} parent=1 // pred_region
      _
    $region45: #{tpu_custom_call.1} parent=1 // pred_fallthru
      _
    %182 = vsyncpa [#allocation3], 1
    %183 = vsyncpa [#allocation5], 1

</llo_original>
